<compile_context>
chip_gen: v6e
topology: v6e:2x2x1
jax: 0.10.0
libtpu: 0.0.40
codegen_flags: <defaults>
</compile_context>

<pallas_src>
import math

import jax
import jax.numpy as jnp
from jax.experimental import pallas as pl
from jax.experimental.pallas import tpu as pltpu


def _critic_kernel(x_ref, w_ref, b_ref, o_ref):
    # x_ref: (tm, K) VMEM, w_ref: (1, K) VMEM, b_ref: (1,) SMEM, o_ref: (1, tm)
    acc = jax.lax.dot_general(
        w_ref[...], x_ref[...],
        dimension_numbers=(((1,), (1,)), ((), ())),   # contract K with K (trans_b)
        preferred_element_type=jnp.float32,
    )                                                  # (1, tm), lane-dense
    o_ref[...] = (acc + b_ref[0]).astype(o_ref.dtype)


def _pick_tile(M, K, bytes_per_elem=4, vmem_budget=8 * 1024 * 1024):
    # Biggest M tile (amortise ~0.35us/step grid overhead) whose double-buffered
    # x tile fits a modest VMEM budget (headroom even on v7x's 64 MiB).
    for tm in (512, 256, 128):
        if M >= tm and 2 * tm * K * bytes_per_elem <= vmem_budget:
            return tm
    return max(8, min(((M + 7) // 8) * 8, 128))


def critic_forward(x, w, b):
    """PyTorch-equivalent Critic forward: x:(M,K), w:(1,K), b:(1,) -> (M,1)."""
    M, K = x.shape
    assert w.shape == (1, K) and b.shape == (1,)

    tm = _pick_tile(M, K)
    m_pad = ((M + tm - 1) // tm) * tm
    if m_pad != M:
        x = jnp.pad(x, ((0, m_pad - M), (0, 0)))

    out = pl.pallas_call(
        _critic_kernel,
        out_shape=jax.ShapeDtypeStruct((1, m_pad), jnp.float32),
        grid_spec=pltpu.PrefetchScalarGridSpec(
            num_scalar_prefetch=0,
            grid=(m_pad // tm,),
            in_specs=[
                pl.BlockSpec((tm, K), lambda i: (i, 0)),            # x tile
                pl.BlockSpec((1, K), lambda i: (0, 0)),             # weight row
                pl.BlockSpec(memory_space=pltpu.MemorySpace.SMEM),  # bias scalar
            ],
            out_specs=pl.BlockSpec((1, tm), lambda i: (0, i)),      # lane-dense
        ),
        compiler_params=pltpu.CompilerParams(
            dimension_semantics=("parallel",),   # megacore sharding over M tiles
        ),
    )(x.astype(jnp.float32), w.astype(jnp.float32), b.astype(jnp.float32))

    # (1, m_pad) and (m_pad, 1) share row-major layout -> free slice + reshape.
    return out[0, :M].reshape(M, 1)


if __name__ == "__main__":
    key = jax.random.PRNGKey(0)
    kx, kw, kb, kx2 = jax.random.split(key, 4)

    input_size = 512    # Critic default: nn.Linear(512, 1)
    batch = 2

    bound = 1.0 / math.sqrt(input_size)   # torch Linear default init range
    x = jax.random.normal(kx, (batch, input_size), jnp.float32)
    w = jax.random.uniform(kw, (1, input_size), jnp.float32, -bound, bound)
    b = jax.random.uniform(kb, (1,), jnp.float32, -bound, bound)

    fwd = jax.jit(critic_forward)

    y = fwd(x, w, b)
    jax.block_until_ready(y)
    assert y.shape == (batch, 1)
    y_ref = x @ w.T + b
    assert bool(jnp.all(jnp.isfinite(y)))
    assert bool(jnp.allclose(y, y_ref, atol=2e-2, rtol=1e-2))

    # Larger batch: exercises the 512-row tiles, M padding and the parallel grid.
    xb = jax.random.normal(kx2, (1300, input_size), jnp.float32)
    yb = fwd(xb, w, b)
    jax.block_until_ready(yb)
    assert yb.shape == (1300, 1)
    assert bool(jnp.allclose(yb, xb @ w.T + b, atol=2e-2, rtol=1e-2))

    print("KERNEL_OK")
</pallas_src>

<mosaic_0001>
module attributes {stable_mosaic.version = 11 : i64} {
  func.func @_critic_kernel(%arg0: i32, %arg1: memref<8x512xf32, #tpu.memory_space<vmem>>, %arg2: memref<1x512xf32, #tpu.memory_space<vmem>>, %arg3: memref<1xf32, #tpu.memory_space<smem>>, %arg4: memref<1x8xf32, #tpu.memory_space<vmem>>) attributes {dimension_semantics = [#tpu.dimension_semantics<parallel>], iteration_bounds = array<i64: 1>, scalar_prefetch = 0 : i64, scratch_operands = 0 : i64, tpu.core_type = #tpu.core_type<tc>, window_params = [{transform_indices = @transform_0, window_bounds = array<i64: 8, 512>}, {pipeline_mode = #tpu.pipeline_mode<synchronous>, transform_indices = @transform_1, window_bounds = array<i64: 1, 512>}, {transform_indices = @transform_2, window_bounds = array<i64: 1>}, {transform_indices = @transform_3, window_bounds = array<i64: 1, 8>}]} {
    %c0 = arith.constant 0 : index
    %c0_0 = arith.constant 0 : index
    %0 = vector.load %arg2[%c0, %c0_0] : memref<1x512xf32, #tpu.memory_space<vmem>>, vector<1x512xf32>
    %c0_1 = arith.constant 0 : index
    %c0_2 = arith.constant 0 : index
    %1 = vector.load %arg1[%c0_1, %c0_2] : memref<8x512xf32, #tpu.memory_space<vmem>>, vector<8x512xf32>
    %cst = arith.constant dense<0.000000e+00> : vector<1x8xf32>
    %2 = tpu.matmul %0, %1, %cst {dimension_numbers = #tpu.dot_dimension_numbers<[1], [1], [0], [0], [0, 0, 1, 0], [], []>} : vector<1x512xf32>, vector<8x512xf32>, vector<1x8xf32> -> vector<1x8xf32>
    %c0_3 = arith.constant 0 : index
    %3 = memref.load %arg3[%c0_3] : memref<1xf32, #tpu.memory_space<smem>>
    %4 = vector.broadcast %3 : f32 to vector<1x8xf32>
    %5 = arith.addf %2, %4 : vector<1x8xf32>
    %c0_4 = arith.constant 0 : index
    %c0_5 = arith.constant 0 : index
    %6 = vector.load %arg4[%c0_4, %c0_5] : memref<1x8xf32, #tpu.memory_space<vmem>>, vector<1x8xf32>
    tpu.vector_store %arg4[%c0_4, %c0_5], %5 {strides = array<i32>} : memref<1x8xf32, #tpu.memory_space<vmem>>, vector<1x8xf32>,
    return
  }
  func.func @transform_0(%arg0: i32) -> (i32, i32) {
    %c0_i32 = arith.constant 0 : i32
    %c0_i32_0 = arith.constant 0 : i32
    return %arg0, %c0_i32 : i32, i32
  }
  func.func @transform_1(%arg0: i32) -> (i32, i32) {
    %c0_i32 = arith.constant 0 : i32
    %c0_i32_0 = arith.constant 0 : i32
    %c0_i32_1 = arith.constant 0 : i32
    return %c0_i32, %c0_i32_0 : i32, i32
  }
  func.func @transform_2(%arg0: i32) -> i32 {
    %c0_i32 = arith.constant 0 : i32
    %c0_i32_0 = arith.constant 0 : i32
    return %c0_i32 : i32
  }
  func.func @transform_3(%arg0: i32) -> (i32, i32) {
    %c0_i32 = arith.constant 0 : i32
    %c0_i32_0 = arith.constant 0 : i32
    return %c0_i32, %arg0 : i32, i32
  }
}

</mosaic_0001>

<llo_original>
// kernel: critic_forward.1
$region0: #{critic_forward.1}
  #allocation0 [shape = 'u32[]', space=smem, size = 0x4, offset = 0x4, fixed_abs, tag = 'smem constant byte address 0x4 - core index']
  #allocation1 [shape = 'u32[144,128]{1,0:T(1,128)}', space=vmem, size = 0x12000, scoped, tag = 'internal scratch']
  #allocation2 [shape = 'f32[1]{0:T(128)S(6)}', space=smem, size = 0x200, scoped, tag = 'scoped memory for critic_forward.1']
  %s0 = inlined_call_operand.vmem [shape: f32[8,512], index: 0, kind: input, shape index: {}]
  %s1 = inlined_call_operand.vmem [shape: f32[1,512], index: 1, kind: input, shape index: {}]
  %s2 = inlined_call_operand.<no memory space> [shape: f32[1], index: 2, kind: input, shape index: {}]
  %s3 = inlined_call_operand.vmem [shape: f32[1,8], index: 3, kind: output, shape index: {}]
  %s4 = sld [smem:[#allocation0]]
  $region22: #{critic_forward.1} parent=0
    _
  %s6 = ssub.s32 1, %s4
  %s7 = scalar_select 0, %s6, %s4
  %8 = sst [smem:[#allocation2]] %s2
  // Predicated region
  $region2: #{critic_forward.1} parent=0 // pred_check
    _
  $region3: #{critic_forward.1} parent=0 // pred_check_branch
    %10 = sbr.rel (0) target = $region5
  $region4: #{critic_forward.1} parent=0 // pred_region
    _
  $region5: #{critic_forward.1} parent=0 // pred_fallthru
    _
  // Predicated region
  $region6: #{critic_forward.1} parent=0 // pred_check
    _
  $region7: #{critic_forward.1} parent=0 // pred_check_branch
    %12 = sbr.rel (0) target = $region9
  $region8: #{critic_forward.1} parent=0 // pred_region
    _
  $region9: #{critic_forward.1} parent=0 // pred_fallthru
    _
  // Predicated region
  $region10: #{critic_forward.1} parent=0 // pred_check
    _
  $region11: #{critic_forward.1} parent=0 // pred_check_branch
    %14 = sbr.rel (0) target = $region13
  $region12: #{critic_forward.1} parent=0 // pred_region
    _
  $region13: #{critic_forward.1} parent=0 // pred_fallthru
    _
  %v15 = vld [vmem:[%s1] sm:$0xf]
  %v16 = vld [vmem:[%s0] sm:$0xff]
  %v17 = vld [vmem:[%s0 + $0x8] sm:$0xff]
  %v18 = vld [vmem:[%s0 + $0x10] sm:$0xff]
  %v19 = vld [vmem:[%s0 + $0x18] sm:$0xff]
  %s20 = sld [smem:[#allocation2]]
  %v21 = vstv %s20
  %v23 = vlaneseq
  %v24 = vshrl.u32 %v23, 7
  %v25 = vsub.s32 0, %v24
  %v26 = vrot.slane %v15, %v25
  %v27 = vlaneseq
  %v28 = vshrl.u32 %v27, 7
  %v29 = vsub.s32 1, %v28
  %v30 = vrot.slane %v15, %v29
  %v31 = vlaneseq
  %v32 = vshrl.u32 %v31, 7
  %v33 = vsub.s32 2, %v32
  %v34 = vrot.slane %v15, %v33
  %v35 = vlaneseq
  %v36 = vshrl.u32 %v35, 7
  %v37 = vsub.s32 3, %v36
  %v38 = vrot.slane %v15, %v37
  %43 = vmatprep.subr.mxu0 0.0
  %44 = vmatpush1.xpose.msra.mxu0 0.0
  %45 = vmatprep.subr.mxu0 0.0
  %46 = vmatpush1.xpose.msra.mxu0 0.0
  %47 = vmatprep.subr.mxu0 0.0
  %48 = vmatpush1.xpose.msra.mxu0 0.0
  %49 = vmatprep.subr.mxu0 0.0
  %50 = vmatpush1.xpose.msra.mxu0 0.0
  %51 = vmatprep.subr.mxu0 0.0
  %52 = vmatpush1.xpose.msra.mxu0 0.0
  %53 = vmatprep.subr.mxu0 0.0
  %54 = vmatpush1.xpose.msra.mxu0 0.0
  %55 = vmatprep.subr.mxu0 0.0
  %56 = vmatpush1.xpose.msra.mxu0 0.0
  %57 = vmatprep.subr.mxu0 0.0
  %58 = vmatpush1.xpose.msra.mxu0 0.0
  %59 = vmatprep.subr.mxu0 0.0
  %60 = vmatpush1.xpose.msra.mxu0 0.0
  %61 = vmatprep.subr.mxu0 0.0
  %62 = vmatpush1.xpose.msra.mxu0 0.0
  %63 = vmatprep.subr.mxu0 0.0
  %64 = vmatpush1.xpose.msra.mxu0 0.0
  %65 = vmatprep.subr.mxu0 0.0
  %66 = vmatpush1.xpose.msra.mxu0 0.0
  %67 = vmatprep.subr.mxu0 0.0
  %68 = vmatpush1.xpose.msra.mxu0 0.0
  %69 = vmatprep.subr.mxu0 0.0
  %70 = vmatpush1.xpose.msra.mxu0 0.0
  %71 = vmatprep.subr.mxu0 0.0
  %72 = vmatpush1.xpose.msra.mxu0 0.0
  %73 = vmatprep.subr.mxu0 %v17
  %74 = vmatpush1.xpose.msra.mxu0 %v16
  %75 = vmatprep.subr.mxu0 0.0
  %76 = vmatpush2.xpose.msra.mxu0 0.0
  %77 = vmatprep.subr.mxu0 0.0
  %78 = vmatpush2.xpose.msra.mxu0 0.0
  %79 = vmatprep.subr.mxu0 0.0
  %80 = vmatpush2.xpose.msra.mxu0 0.0
  %81 = vmatprep.subr.mxu0 0.0
  %82 = vmatpush2.xpose.msra.mxu0 0.0
  %83 = vmatprep.subr.mxu0 0.0
  %84 = vmatpush2.xpose.msra.mxu0 0.0
  %85 = vmatprep.subr.mxu0 0.0
  %86 = vmatpush2.xpose.msra.mxu0 0.0
  %87 = vmatprep.subr.mxu0 0.0
  %88 = vmatpush2.xpose.msra.mxu0 0.0
  %89 = vmatprep.subr.mxu0 0.0
  %90 = vmatpush2.xpose.msra.mxu0 0.0
  %91 = vmatprep.subr.mxu0 0.0
  %92 = vmatpush2.xpose.msra.mxu0 0.0
  %93 = vmatprep.subr.mxu0 0.0
  %94 = vmatpush2.xpose.msra.mxu0 0.0
  %95 = vmatprep.subr.mxu0 0.0
  %96 = vmatpush2.xpose.msra.mxu0 0.0
  %97 = vmatprep.subr.mxu0 0.0
  %98 = vmatpush2.xpose.msra.mxu0 0.0
  %99 = vmatprep.subr.mxu0 0.0
  %100 = vmatpush2.xpose.msra.mxu0 0.0
  %101 = vmatprep.subr.mxu0 0.0
  %102 = vmatpush2.xpose.msra.mxu0 0.0
  %103 = vmatprep.subr.mxu0 0.0
  %104 = vmatpush2.xpose.msra.mxu0 0.0
  %105 = vmatprep.subr.mxu0 0.0
  %106 = vmatpush2.xpose.msra.mxu0 0.0
  %107 = vmatprep.mubr.f32.mxu0 %v30
  %108 = vmatmul.mubr.f32.gmra.mxu0 %v26
  %v109 = vpop.f32.mrf.mxu0
  %v110 = vadd.f32 %v21, %v109
  %v111 = vpop.f32.mrf.mxu0
  %112 = vdwg.mxu0
  %113 = vmatprep.subr.mxu0 0.0
  %114 = vmatpush1.xpose.msra.mxu0 0.0
  %115 = vmatprep.subr.mxu0 0.0
  %116 = vmatpush1.xpose.msra.mxu0 0.0
  %117 = vmatprep.subr.mxu0 0.0
  %118 = vmatpush1.xpose.msra.mxu0 0.0
  %119 = vmatprep.subr.mxu0 0.0
  %120 = vmatpush1.xpose.msra.mxu0 0.0
  %121 = vmatprep.subr.mxu0 0.0
  %122 = vmatpush1.xpose.msra.mxu0 0.0
  %123 = vmatprep.subr.mxu0 0.0
  %124 = vmatpush1.xpose.msra.mxu0 0.0
  %125 = vmatprep.subr.mxu0 0.0
  %126 = vmatpush1.xpose.msra.mxu0 0.0
  %127 = vmatprep.subr.mxu0 0.0
  %128 = vmatpush1.xpose.msra.mxu0 0.0
  %129 = vmatprep.subr.mxu0 0.0
  %130 = vmatpush1.xpose.msra.mxu0 0.0
  %131 = vmatprep.subr.mxu0 0.0
  %132 = vmatpush1.xpose.msra.mxu0 0.0
  %133 = vmatprep.subr.mxu0 0.0
  %134 = vmatpush1.xpose.msra.mxu0 0.0
  %135 = vmatprep.subr.mxu0 0.0
  %136 = vmatpush1.xpose.msra.mxu0 0.0
  %137 = vmatprep.subr.mxu0 0.0
  %138 = vmatpush1.xpose.msra.mxu0 0.0
  %139 = vmatprep.subr.mxu0 0.0
  %140 = vmatpush1.xpose.msra.mxu0 0.0
  %141 = vmatprep.subr.mxu0 0.0
  %142 = vmatpush1.xpose.msra.mxu0 0.0
  %143 = vmatprep.subr.mxu0 %v19
  %144 = vmatpush1.xpose.msra.mxu0 %v18
  %145 = vmatprep.subr.mxu0 0.0
  %146 = vmatpush2.xpose.msra.mxu0 0.0
  %147 = vmatprep.subr.mxu0 0.0
  %148 = vmatpush2.xpose.msra.mxu0 0.0
  %149 = vmatprep.subr.mxu0 0.0
  %150 = vmatpush2.xpose.msra.mxu0 0.0
  %151 = vmatprep.subr.mxu0 0.0
  %152 = vmatpush2.xpose.msra.mxu0 0.0
  %153 = vmatprep.subr.mxu0 0.0
  %154 = vmatpush2.xpose.msra.mxu0 0.0
  %155 = vmatprep.subr.mxu0 0.0
  %156 = vmatpush2.xpose.msra.mxu0 0.0
  %157 = vmatprep.subr.mxu0 0.0
  %158 = vmatpush2.xpose.msra.mxu0 0.0
  %159 = vmatprep.subr.mxu0 0.0
  %160 = vmatpush2.xpose.msra.mxu0 0.0
  %161 = vmatprep.subr.mxu0 0.0
  %162 = vmatpush2.xpose.msra.mxu0 0.0
  %163 = vmatprep.subr.mxu0 0.0
  %164 = vmatpush2.xpose.msra.mxu0 0.0
  %165 = vmatprep.subr.mxu0 0.0
  %166 = vmatpush2.xpose.msra.mxu0 0.0
  %167 = vmatprep.subr.mxu0 0.0
  %168 = vmatpush2.xpose.msra.mxu0 0.0
  %169 = vmatprep.subr.mxu0 0.0
  %170 = vmatpush2.xpose.msra.mxu0 0.0
  %171 = vmatprep.subr.mxu0 0.0
  %172 = vmatpush2.xpose.msra.mxu0 0.0
  %173 = vmatprep.subr.mxu0 0.0
  %174 = vmatpush2.xpose.msra.mxu0 0.0
  %175 = vmatprep.subr.mxu0 0.0
  %176 = vmatpush2.xpose.msra.mxu0 0.0
  %177 = vmatprep.mubr.f32.mxu0 %v38
  %178 = vmatmul.mubr.f32.gmra.mxu0 %v34
  %v179 = vpop.f32.mrf.mxu0
  %v180 = vadd.f32 %v110, %v179
  %v181 = vpop.f32.mrf.mxu0
  %182 = vdwg.mxu0
  %vm183 = vcmask 57344
  %184 = vst.msk [vmem:[%s3] sm:$0x1] %vm183, %v180
  // Predicated region
  $region14: #{critic_forward.1} parent=0 // pred_check
    _
  $region15: #{critic_forward.1} parent=0 // pred_check_branch
    %186 = sbr.rel (0) target = $region17
  $region16: #{critic_forward.1} parent=0 // pred_region
    _
  $region17: #{critic_forward.1} parent=0 // pred_fallthru
    _
  // Predicated region
  $region18: #{critic_forward.1} parent=0 // pred_check
    _
  $region19: #{critic_forward.1} parent=0 // pred_check_branch
    %188 = sbr.rel (0) target = $region21
  $region20: #{critic_forward.1} parent=0 // pred_region
    _
  $region21: #{critic_forward.1} parent=0 // pred_fallthru
    _

</llo_original>
